<compile_context>
chip_gen: v5e
topology: v5e:2x2
jax: 0.10.0
libtpu: 0.0.40
codegen_flags: <defaults>
</compile_context>

<pallas_src>
import math

import jax
import jax.numpy as jnp
from jax.experimental import pallas as pl
from jax.experimental.pallas import tpu as pltpu


def _round_up(x: int, m: int) -> int:
    return ((x + m - 1) // m) * m


# ----------------------------- Pallas kernel ------------------------------- #
def _query_proj_kernel(emb_ref, w_ref, b_ref, o_ref):
    # (TM, in_c_p) bf16 @ (in_c_p, out_c_p) bf16 on the MXU, f32 accumulation,
    # bias add in f32, store f32 (lane-dense: out_c_p % 128 == 0).
    acc = jnp.dot(emb_ref[...], w_ref[...], preferred_element_type=jnp.float32)
    o_ref[...] = (acc + b_ref[...]).astype(o_ref.dtype)


def _query_proj(emb: jax.Array, w: jax.Array, b: jax.Array, *, tm: int = 512) -> jax.Array:
    """Compute emb @ w + b, tiled over the Sq axis.

    emb: (Sq, in_c), w: (in_c, out_c), b: (1, out_c) or (out_c,).
    Channel dims are zero-padded to multiples of 128 (lane-dense MXU operands
    and unmasked output stores); Sq is padded to a multiple of the row tile.
    Returns (Sq, out_c) float32.
    """
    sq, in_c = emb.shape
    out_c = w.shape[1]
    b = b.reshape(1, -1)

    in_c_p = _round_up(in_c, 128)
    out_c_p = _round_up(out_c, 128)
    tm = min(tm, _round_up(sq, 8))          # don't over-tile tiny demos
    sq_p = _round_up(sq, tm)
    n_tiles = sq_p // tm

    # Zero-pad (contraction padding with zeros is exact) and cast to bf16.
    emb_p = jnp.pad(emb.astype(jnp.float32),
                    ((0, sq_p - sq), (0, in_c_p - in_c))).astype(jnp.bfloat16)
    w_p = jnp.pad(w.astype(jnp.float32),
                  ((0, in_c_p - in_c), (0, out_c_p - out_c))).astype(jnp.bfloat16)
    b_p = jnp.pad(b.astype(jnp.float32), ((0, 0), (0, out_c_p - out_c)))

    # VMEM budget: double-buffered emb/out tiles + resident W + bias, with 2x headroom.
    vmem_bytes = (
        2 * tm * in_c_p * 2        # emb tiles (bf16, double-buffered)
        + in_c_p * out_c_p * 2     # W resident (bf16)
        + 2 * 8 * out_c_p * 4      # bias (padded sublane), double-buffered
        + 2 * tm * out_c_p * 4     # out tiles (f32, double-buffered)
    )
    vmem_limit = int(min(max(2 * vmem_bytes, 4 << 20), 32 << 20))

    cost = pl.CostEstimate(
        flops=2 * sq_p * in_c_p * out_c_p,
        transcendentals=0,
        bytes_accessed=(emb_p.size * 2 + w_p.size * 2 + b_p.size * 4
                        + sq_p * out_c_p * 4),
    )

    out_p = pl.pallas_call(
        _query_proj_kernel,
        out_shape=jax.ShapeDtypeStruct((sq_p, out_c_p), jnp.float32),
        grid=(n_tiles,),
        in_specs=[
            pl.BlockSpec((tm, in_c_p), lambda i: (i, 0)),        # emb tile
            pl.BlockSpec((in_c_p, out_c_p), lambda i: (0, 0)),   # W (resident)
            pl.BlockSpec((1, out_c_p), lambda i: (0, 0)),        # bias (resident)
        ],
        out_specs=pl.BlockSpec((tm, out_c_p), lambda i: (i, 0)),
        compiler_params=pltpu.CompilerParams(
            dimension_semantics=("parallel",),   # shard Sq tiles across v7x's 2 TCs
            vmem_limit_bytes=vmem_limit,
        ),
        cost_estimate=cost,
    )(emb_p, w_p, b_p)

    return out_p[:sq, :out_c]


# --------------------------- Module-style wrapper --------------------------- #
class QueryGeneratorPallas:
    """JAX/Pallas counterpart of pointbev QueryGenerator.

    query_shape: tuple giving the BEV query grid, e.g. (H_bev, W_bev).
    in_c:        channel dim of the learned query embedding.
    out_c:       output channel dim after linear projection.
    """

    def __init__(self, query_shape, in_c, out_c, key):
        self._query_seq_len = tuple(query_shape)
        self._output_c = out_c
        sq = int(math.prod(query_shape))

        k_emb, k_w, k_b = jax.random.split(key, 3)
        # Parameters stored in bf16 (native MXU dtype on v5e/v6e/v7x, half the
        # HBM traffic); bias kept in f32 (added after f32 accumulation).
        self.query_embed = (
            jax.random.normal(k_emb, (sq, in_c), jnp.float32) * 0.02
        ).astype(jnp.bfloat16)
        bound = 1.0 / math.sqrt(in_c)
        self.proj_w = jax.random.uniform(
            k_w, (in_c, out_c), jnp.float32, minval=-bound, maxval=bound
        ).astype(jnp.bfloat16)
        self.proj_b = jax.random.uniform(
            k_b, (1, out_c), jnp.float32, minval=-bound, maxval=bound
        )
        self._cached_q = None  # projection is x-independent -> compute once

    @property
    def query_shape(self):
        return self._query_seq_len

    @property
    def out_c(self):
        return self._output_c

    def __call__(self, x: jax.Array) -> dict:
        # x: (B, C, H, W) feature map (NCHW). Only its batch size is used.
        b = x.shape[0]
        if self._cached_q is None:
            self._cached_q = _query_proj(self.query_embed, self.proj_w, self.proj_b)
        q = self._cached_q                                        # (Sq, out_c) f32
        # TODO(synk): broadcast_to materializes (B, Sq, out_c) in HBM when run
        # eagerly; downstream consumers should prefer the cached 2-D q and a
        # lazy broadcast under jit.
        q = jnp.broadcast_to(q[None], (b,) + q.shape)             # (B, Sq, out_c)
        return {"query": q, "query_shape": self._query_seq_len}


# ---------------------------------- main ----------------------------------- #
if __name__ == "__main__":
    key = jax.random.PRNGKey(0)
    k_params, k_x = jax.random.split(key)

    # Small, module-consistent shapes.
    query_shape = (8, 8)     # BEV query grid -> seq len 64
    in_c, out_c = 32, 32
    B, C, H, W = 2, 4, 16, 16

    gen = QueryGeneratorPallas(query_shape, in_c, out_c, k_params)
    x = jax.random.normal(k_x, (B, C, H, W), jnp.float32)

    out = gen(x)
    q = jax.block_until_ready(out["query"])

    # Reference check (plain JAX, f32 math on the bf16 parameters).
    ref = (
        gen.query_embed.astype(jnp.float32) @ gen.proj_w.astype(jnp.float32)
        + gen.proj_b
    )
    ref = jnp.broadcast_to(ref[None], (B,) + ref.shape)
    assert q.shape == (B, math.prod(query_shape), out_c)
    assert jnp.allclose(q, ref, atol=1e-3, rtol=1e-3)

    print("KERNEL_OK")
</pallas_src>

<mosaic_0001>
module attributes {stable_mosaic.version = 11 : i64} {
  func.func @_query_proj_kernel(%arg0: i32, %arg1: memref<64x128xbf16, #tpu.memory_space<vmem>>, %arg2: memref<128x128xbf16, #tpu.memory_space<vmem>>, %arg3: memref<1x128xf32, #tpu.memory_space<vmem>>, %arg4: memref<64x128xf32, #tpu.memory_space<vmem>>) attributes {dimension_semantics = [#tpu.dimension_semantics<parallel>], iteration_bounds = array<i64: 1>, scalar_prefetch = 0 : i64, scratch_operands = 0 : i64, tpu.core_type = #tpu.core_type<tc>, window_params = [{transform_indices = @transform_0, window_bounds = array<i64: 64, 128>}, {pipeline_mode = #tpu.pipeline_mode<synchronous>, transform_indices = @transform_1, window_bounds = array<i64: 128, 128>}, {pipeline_mode = #tpu.pipeline_mode<synchronous>, transform_indices = @transform_2, window_bounds = array<i64: 1, 128>}, {transform_indices = @transform_3, window_bounds = array<i64: 64, 128>}]} {
    %c0 = arith.constant 0 : index
    %c0_0 = arith.constant 0 : index
    %0 = vector.load %arg1[%c0, %c0_0] : memref<64x128xbf16, #tpu.memory_space<vmem>>, vector<64x128xbf16>
    %c0_1 = arith.constant 0 : index
    %c0_2 = arith.constant 0 : index
    %1 = vector.load %arg2[%c0_1, %c0_2] : memref<128x128xbf16, #tpu.memory_space<vmem>>, vector<128x128xbf16>
    %cst = arith.constant dense<0.000000e+00> : vector<64x128xf32>
    %2 = tpu.matmul %0, %1, %cst {dimension_numbers = #tpu.dot_dimension_numbers<[1], [0], [0], [1], [0, 0, 1, 1], [], []>} : vector<64x128xbf16>, vector<128x128xbf16>, vector<64x128xf32> -> vector<64x128xf32>
    %c0_3 = arith.constant 0 : index
    %c0_4 = arith.constant 0 : index
    %3 = vector.load %arg3[%c0_3, %c0_4] : memref<1x128xf32, #tpu.memory_space<vmem>>, vector<1x128xf32>
    %4 = vector.broadcast %3 : vector<1x128xf32> to vector<64x128xf32>
    %5 = arith.addf %2, %4 : vector<64x128xf32>
    %c0_5 = arith.constant 0 : index
    %c0_6 = arith.constant 0 : index
    %6 = vector.load %arg4[%c0_5, %c0_6] : memref<64x128xf32, #tpu.memory_space<vmem>>, vector<64x128xf32>
    tpu.vector_store %arg4[%c0_5, %c0_6], %5 {strides = array<i32>} : memref<64x128xf32, #tpu.memory_space<vmem>>, vector<64x128xf32>,
    return
  }
  func.func @transform_0(%arg0: i32) -> (i32, i32) {
    %c0_i32 = arith.constant 0 : i32
    %c0_i32_0 = arith.constant 0 : i32
    return %arg0, %c0_i32 : i32, i32
  }
  func.func @transform_1(%arg0: i32) -> (i32, i32) {
    %c0_i32 = arith.constant 0 : i32
    %c0_i32_0 = arith.constant 0 : i32
    %c0_i32_1 = arith.constant 0 : i32
    return %c0_i32, %c0_i32_0 : i32, i32
  }
  func.func @transform_2(%arg0: i32) -> (i32, i32) {
    %c0_i32 = arith.constant 0 : i32
    %c0_i32_0 = arith.constant 0 : i32
    %c0_i32_1 = arith.constant 0 : i32
    return %c0_i32, %c0_i32_0 : i32, i32
  }
  func.func @transform_3(%arg0: i32) -> (i32, i32) {
    %c0_i32 = arith.constant 0 : i32
    %c0_i32_0 = arith.constant 0 : i32
    return %arg0, %c0_i32 : i32, i32
  }
}

</mosaic_0001>

<llo_original>
// kernel: tpu_custom_call.1
$region0: #{tpu_custom_call.1}
  #allocation0 [shape = 'u32[]', space=smem, size = 0x4, offset = 0x4, fixed_abs, tag = 'smem constant byte address 0x4 - core index']
  #allocation1 [shape = 'u32[72,128]{1,0:T(1,128)}', space=vmem, size = 0x9000, scoped, tag = 'internal scratch']
  %s0 = inlined_call_operand.hbm [shape: bf16[64,128], index: 0, kind: input, shape index: {}]
  %s1 = inlined_call_operand.hbm [shape: bf16[128,128], index: 1, kind: input, shape index: {}]
  %s2 = inlined_call_operand.vmem [shape: f32[1,128], index: 2, kind: input, shape index: {}]
  %s3 = inlined_call_operand.hbm [shape: f32[64,128], index: 3, kind: output, shape index: {}]
  %s4 = sld [smem:[#allocation0]]
  $region30: #{tpu_custom_call.1} parent=0
    _
  %s6 = ssub.s32 1, %s4
  %s7 = scalar_select 0, %s6, %s4
  $region1: #{tpu_custom_call.1} parent=0
    #allocation2 [shape = 'u8[16384]{0}', space=vmem, size = 0x4000, scoped, tag = 'input window, operand 0, single buffered']
    #allocation3 [shape = 's32[1]{0}', space=sflag, size = 0x4, scoped, tag = 'scoped memory for tpu_custom_call.1']
    #allocation4 [shape = 's32[1]{0}', space=sflag, size = 0x4, scoped, tag = 'scoped memory for tpu_custom_call.1']
    #allocation5 [shape = 'u8[32768]{0}', space=vmem, size = 0x8000, scoped, tag = 'input window, operand 1, single buffered']
    #allocation6 [shape = 's32[1]{0}', space=sflag, size = 0x4, scoped, tag = 'scoped memory for tpu_custom_call.1']
    #allocation7 [shape = 'u8[32768]{0}', space=vmem, size = 0x8000, scoped, tag = 'output window, operand 0, single buffered']
    %8 = vsyncpa [#allocation3], 0
    %9 = vsyncpa [#allocation6], 0
    %10 = vsyncpa [#allocation4], 0
    // Predicated region
    $region2: #{tpu_custom_call.1} parent=1 // pred_check
      _
    $region3: #{tpu_custom_call.1} parent=1 // pred_check_branch
      %12 = sbr.rel (0) target = $region5
    $region4: #{tpu_custom_call.1} parent=1 // pred_region
      %14 = vsyncadd [#allocation3], 0
      %s15 = sshll.u32 %s0, 4
      %s16 = int_to_ptr.hbm [resolvable:$true] %s15
      %s17 = sshll.u32 [#allocation2], 4
      %s18 = int_to_ptr.vmem [resolvable:$true] %s17
      %23 = dma.hbm_to_vmem [thread:$0]  %s16, 512, %s18, [#allocation3], 64, 64, 4
    $region5: #{tpu_custom_call.1} parent=1 // pred_fallthru
      _
    // Predicated region
    $region6: #{tpu_custom_call.1} parent=1 // pred_check
      _
    $region7: #{tpu_custom_call.1} parent=1 // pred_check_branch
      %25 = sbr.rel (0) target = $region9
    $region8: #{tpu_custom_call.1} parent=1 // pred_region
      %27 = vsyncadd [#allocation6], 0
      %s28 = sshll.u32 %s1, 4
      %s29 = int_to_ptr.hbm [resolvable:$true] %s28
      %s30 = sshll.u32 [#allocation5], 4
      %s31 = int_to_ptr.vmem [resolvable:$true] %s30
      %36 = dma.hbm_to_vmem [thread:$0]  %s29, 1024, %s31, [#allocation6], 64, 64, 4
    $region9: #{tpu_custom_call.1} parent=1 // pred_fallthru
      _
    // Predicated region
    $region10: #{tpu_custom_call.1} parent=1 // pred_check
      _
    $region11: #{tpu_custom_call.1} parent=1 // pred_check_branch
      %38 = sbr.rel (0) target = $region13
    $region12: #{tpu_custom_call.1} parent=1 // pred_region
      _
    $region13: #{tpu_custom_call.1} parent=1 // pred_fallthru
      _
    // Predicated region
    $region14: #{tpu_custom_call.1} parent=1 // pred_check
      _
    $region15: #{tpu_custom_call.1} parent=1 // pred_check_branch
      %40 = sbr.rel (0) target = $region17
    $region16: #{tpu_custom_call.1} parent=1 // pred_region
      %42 = dma.done [#allocation3], 512
    $region17: #{tpu_custom_call.1} parent=1 // pred_fallthru
      _
    // Predicated region
    $region18: #{tpu_custom_call.1} parent=1 // pred_check
      _
    $region19: #{tpu_custom_call.1} parent=1 // pred_check_branch
      %44 = sbr.rel (0) target = $region21
    $region20: #{tpu_custom_call.1} parent=1 // pred_region
      %46 = dma.done [#allocation6], 1024
    $region21: #{tpu_custom_call.1} parent=1 // pred_fallthru
      _
    %v47 = vld [vmem:[#allocation2] sm:$0xf]
    %v48 = vld [vmem:[#allocation2 + $0x4] sm:$0xf]
    %v49 = vld [vmem:[#allocation2 + $0x8] sm:$0xf]
    %v50 = vld [vmem:[#allocation2 + $0xc] sm:$0xf]
    %v51 = vld [vmem:[#allocation2 + $0x10] sm:$0xf]
    %v52 = vld [vmem:[#allocation2 + $0x14] sm:$0xf]
    %v53 = vld [vmem:[#allocation2 + $0x18] sm:$0xf]
    %v54 = vld [vmem:[#allocation2 + $0x1c] sm:$0xf]
    %v55 = vld [vmem:[#allocation5] sm:$0xf]
    %v56 = vld [vmem:[#allocation5 + $0x4] sm:$0xf]
    %v57 = vld [vmem:[#allocation5 + $0x8] sm:$0xf]
    %v58 = vld [vmem:[#allocation5 + $0xc] sm:$0xf]
    %v59 = vld [vmem:[#allocation5 + $0x10] sm:$0xf]
    %v60 = vld [vmem:[#allocation5 + $0x14] sm:$0xf]
    %v61 = vld [vmem:[#allocation5 + $0x18] sm:$0xf]
    %v62 = vld [vmem:[#allocation5 + $0x1c] sm:$0xf]
    %v63 = vld [vmem:[#allocation5 + $0x20] sm:$0xf]
    %v64 = vld [vmem:[#allocation5 + $0x24] sm:$0xf]
    %v65 = vld [vmem:[#allocation5 + $0x28] sm:$0xf]
    %v66 = vld [vmem:[#allocation5 + $0x2c] sm:$0xf]
    %v67 = vld [vmem:[#allocation5 + $0x30] sm:$0xf]
    %v68 = vld [vmem:[#allocation5 + $0x34] sm:$0xf]
    %v69 = vld [vmem:[#allocation5 + $0x38] sm:$0xf]
    %v70 = vld [vmem:[#allocation5 + $0x3c] sm:$0xf]
    %v71 = vld [vmem:[%s2] sm:$0x1]
    %v73 = vperm.slane %v71, 0
    %v83 = vunpack.c.l.b16 %v47
    %v84 = vunpack.c.l.b16 %v48
    %v85 = vunpack.c.l.b16 %v49
    %v86 = vunpack.c.l.b16 %v50
    %v87 = vunpack.c.l.b16 %v51
    %v88 = vunpack.c.l.b16 %v52
    %v89 = vunpack.c.l.b16 %v53
    %v90 = vunpack.c.l.b16 %v54
    %v91 = vpack.c.b16 %v84, %v83
    %v92 = vpack.c.b16 %v86, %v85
    %v93 = vpack.c.b16 %v88, %v87
    %v94 = vpack.c.b16 %v90, %v89
    %v115 = vunpack.c.l.b16 %v55
    %v116 = vunpack.c.l.b16 %v56
    %v117 = vunpack.c.l.b16 %v57
    %v118 = vunpack.c.l.b16 %v58
    %v119 = vunpack.c.l.b16 %v59
    %v120 = vunpack.c.l.b16 %v60
    %v121 = vunpack.c.l.b16 %v61
    %v122 = vunpack.c.l.b16 %v62
    %v123 = vunpack.c.l.b16 %v63
    %v124 = vunpack.c.l.b16 %v64
    %v125 = vunpack.c.l.b16 %v65
    %v126 = vunpack.c.l.b16 %v66
    %v127 = vunpack.c.l.b16 %v67
    %v128 = vunpack.c.l.b16 %v68
    %v129 = vunpack.c.l.b16 %v69
    %v130 = vunpack.c.l.b16 %v70
    %v131 = vpack.c.b16 %v116, %v115
    %v132 = vpack.c.b16 %v118, %v117
    %v133 = vpack.c.b16 %v120, %v119
    %v134 = vpack.c.b16 %v122, %v121
    %v135 = vpack.c.b16 %v124, %v123
    %v136 = vpack.c.b16 %v126, %v125
    %v137 = vpack.c.b16 %v128, %v127
    %v138 = vpack.c.b16 %v130, %v129
    %147 = vmatpush.bf16.msra.mxu0 %v138
    %148 = vmatpush.bf16.msra.mxu0 %v137
    %149 = vmatpush.bf16.msra.mxu0 %v136
    %150 = vmatpush.bf16.msra.mxu0 %v135
    %151 = vmatpush.bf16.msra.mxu0 %v134
    %152 = vmatpush.bf16.msra.mxu0 %v133
    %153 = vmatpush.bf16.msra.mxu0 %v132
    %154 = vmatpush.bf16.msra.mxu0 %v131
    %155 = vmatmul.bf16.gmra.mxu0 %v91
    %v156 = vpop.f32.mrf.mxu0
    %v157 = vadd.f32 %v73, %v156
    %v158 = vpop.f32.mrf.mxu0
    %v159 = vadd.f32 %v73, %v158
    %160 = vmatmul.bf16.gmra.mxu0 %v92
    %v161 = vpop.f32.mrf.mxu0
    %v162 = vadd.f32 %v73, %v161
    %v163 = vpop.f32.mrf.mxu0
    %v164 = vadd.f32 %v73, %v163
    %165 = vmatmul.bf16.gmra.mxu0 %v93
    %v166 = vpop.f32.mrf.mxu0
    %v167 = vadd.f32 %v73, %v166
    %v168 = vpop.f32.mrf.mxu0
    %v169 = vadd.f32 %v73, %v168
    %170 = vmatmul.bf16.gmra.mxu0 %v94
    %v171 = vpop.f32.mrf.mxu0
    %v172 = vadd.f32 %v73, %v171
    %v173 = vpop.f32.mrf.mxu0
    %v174 = vadd.f32 %v73, %v173
    %175 = vdwg.mxu0
    %176 = vst [vmem:[#allocation7] sm:$0xff] %v157
    %177 = vst [vmem:[#allocation7 + $0x8] sm:$0xff] %v159
    %178 = vst [vmem:[#allocation7 + $0x10] sm:$0xff] %v162
    %179 = vst [vmem:[#allocation7 + $0x18] sm:$0xff] %v164
    %180 = vst [vmem:[#allocation7 + $0x20] sm:$0xff] %v167
    %181 = vst [vmem:[#allocation7 + $0x28] sm:$0xff] %v169
    %182 = vst [vmem:[#allocation7 + $0x30] sm:$0xff] %v172
    %183 = vst [vmem:[#allocation7 + $0x38] sm:$0xff] %v174
    // Predicated region
    $region22: #{tpu_custom_call.1} parent=1 // pred_check
      _
    $region23: #{tpu_custom_call.1} parent=1 // pred_check_branch
      %185 = sbr.rel (0) target = $region25
    $region24: #{tpu_custom_call.1} parent=1 // pred_region
      %187 = vsyncadd [#allocation4], 0
      %s188 = sshll.u32 [#allocation7], 4
      %s189 = int_to_ptr.vmem [resolvable:$true] %s188
      %s190 = sshll.u32 %s3, 4
      %s191 = int_to_ptr.hbm [resolvable:$true] %s190
      %196 = dma.vmem_to_hbm [thread:$0]  %s189, 1024, %s191, [#allocation4], 128, 128, 8
    $region25: #{tpu_custom_call.1} parent=1 // pred_fallthru
      _
    // Predicated region
    $region26: #{tpu_custom_call.1} parent=1 // pred_check
      _
    $region27: #{tpu_custom_call.1} parent=1 // pred_check_branch
      %198 = sbr.rel (0) target = $region29
    $region28: #{tpu_custom_call.1} parent=1 // pred_region
      %200 = dma.done [#allocation4], 1024
    $region29: #{tpu_custom_call.1} parent=1 // pred_fallthru
      _
    %201 = vsyncpa [#allocation3], 1
    %202 = vsyncpa [#allocation6], 1
    %203 = vsyncpa [#allocation4], 1

</llo_original>
